<compile_context>
chip_gen: v7x
topology: tpu7x:2x2x1
jax: 0.10.0
libtpu: 0.0.40
codegen_flags: <defaults>
</compile_context>

<pallas_src>
import math
import functools

import jax
import jax.numpy as jnp
from jax.experimental import pallas as pl
from jax.experimental.pallas import tpu as pltpu


# ---------------------------------------------------------------------------
# Glue: build the PE buffer exactly like the PyTorch __init__ does.
# ---------------------------------------------------------------------------
def make_pe_table(d_model: int, max_len: int = 5000, dtype=jnp.float32):
    position = jnp.arange(0, max_len, dtype=jnp.float32)[:, None]          # (L, 1)
    div_term = jnp.exp(
        jnp.arange(0, d_model, 2, dtype=jnp.float32)
        * -(math.log(10000.0) / d_model)
    )                                                                      # (D/2,)
    angles = position * div_term                                           # (L, D/2)
    pe = jnp.zeros((max_len, d_model), dtype=jnp.float32)
    pe = pe.at[:, 0::2].set(jnp.sin(angles))
    pe = pe.at[:, 1::2].set(jnp.cos(angles))
    return pe.astype(dtype)                                                # (L, D)


# ---------------------------------------------------------------------------
# Kernels (operate on a lane-dense (rows, cols) flattened view)
# ---------------------------------------------------------------------------
def _pe_add_kernel(x_ref, pe_ref, o_ref):
    # x_ref: (TB, TC), pe_ref: (1, TC) -> sublane-broadcast add over rows.
    o_ref[...] = x_ref[...] + pe_ref[...]


def _pe_add_dropout_kernel(seed_ref, x_ref, pe_ref, o_ref, *,
                           threshold24, scale, n_cols):
    # Inverted dropout with a tiling-invariant, counter-based keep mask.
    tb, tc = x_ref.shape
    y = x_ref[...] + pe_ref[...]

    j = pl.program_id(0)    # column-tile index
    b = pl.program_id(1)    # row (batch)-tile index

    # Global element index as a uint32 counter (unique per element).
    row = (jax.lax.broadcasted_iota(jnp.int32, (tb, tc), 0)
           + b * tb).astype(jnp.uint32)
    col = (jax.lax.broadcasted_iota(jnp.int32, (tb, tc), 1)
           + j * tc).astype(jnp.uint32)
    ctr = row * jnp.uint32(n_cols) + col

    # lowbias32-style multiply/xorshift hash, mixed with the seed.
    seed = seed_ref[0].astype(jnp.uint32)
    h = ctr ^ (seed * jnp.uint32(0x9E3779B9))
    h = h * jnp.uint32(0x7FEB352D)
    h = h ^ (h >> jnp.uint32(15))
    h = h * jnp.uint32(0x846CA68B)
    h = h ^ (h >> jnp.uint32(16))
    h = h * jnp.uint32(0x9E3779B1)
    h = h ^ (h >> jnp.uint32(16))

    # Top 24 bits -> uniform integer in [0, 2^24); keep iff r >= p * 2^24.
    r24 = (h >> jnp.uint32(8)).astype(jnp.int32)
    keep = r24 >= jnp.int32(threshold24)
    o_ref[...] = jnp.where(keep, y * jnp.asarray(scale, y.dtype),
                           jnp.zeros_like(y))


# ---------------------------------------------------------------------------
# Tile sizing: pick blocks by VMEM byte budget (lane-dense columns).
# ---------------------------------------------------------------------------
def _choose_tiles(n_rows, n_cols, itemsize, *,
                  block_budget_bytes=4 << 20, max_rows=512):
    # Rows: whole batch when modest (full-dim block is always legal),
    # otherwise a multiple of 8.
    tb = n_rows if n_rows <= max_rows else max_rows
    # Columns: grow (multiple of 128) until the per-block byte budget.
    cols_fit = (block_budget_bytes // max(tb * itemsize, 1)) // 128 * 128
    cols_fit = max(cols_fit, 128)
    tc = n_cols if n_cols <= cols_fit else cols_fit
    return tb, tc


# ---------------------------------------------------------------------------
# Wrapper
# ---------------------------------------------------------------------------
def positional_encoding(x, pe_table, *, dropout_p=0.1, training=False, seed=0,
                        block_budget_bytes=4 << 20, donate_x=False):
    """x: (B, S, D). Returns x + pe[:S] (with inverted dropout if training)."""
    B, S, D = x.shape
    SD = S * D
    itemsize = jnp.dtype(x.dtype).itemsize

    x2 = x.reshape(B, SD)                                      # lane-dense view
    pe_flat = pe_table[:S, :].reshape(1, SD).astype(x.dtype)   # compute in x dtype

    tb, tc = _choose_tiles(B, SD, itemsize,
                           block_budget_bytes=block_budget_bytes)

    # Column tiles OUTER (shards across v7x's 2 TCs), batch tiles INNER so the
    # PE block index is constant along the inner axis (PE stays VMEM-resident).
    grid = (pl.cdiv(SD, tc), pl.cdiv(B, tb))

    x_spec = pl.BlockSpec((tb, tc), lambda j, b, *_: (b, j))
    pe_spec = pl.BlockSpec((1, tc), lambda j, b, *_: (0, j))
    out_spec = pl.BlockSpec((tb, tc), lambda j, b, *_: (b, j))
    out_shape = jax.ShapeDtypeStruct((B, SD), x.dtype)

    cparams = pltpu.CompilerParams(
        dimension_semantics=("parallel", "parallel"),   # pure data parallel
        vmem_limit_bytes=48 << 20,  # lift v5e's 16 MiB scoped default; safe on v7x
    )
    cost = pl.CostEstimate(
        flops=B * SD,                                   # one add per element
        transcendentals=0,
        bytes_accessed=(2 * B * SD + SD) * itemsize,    # read x + pe, write out
    )

    if not training or dropout_p == 0.0:
        out2 = pl.pallas_call(
            _pe_add_kernel,
            out_shape=out_shape,
            grid_spec=pltpu.PrefetchScalarGridSpec(
                num_scalar_prefetch=0,
                grid=grid,
                in_specs=[x_spec, pe_spec],
                out_specs=out_spec,
            ),
            compiler_params=cparams,
            cost_estimate=cost,
            input_output_aliases=({0: 0} if donate_x else {}),
        )(x2, pe_flat)
        return out2.reshape(B, S, D)

    p = float(dropout_p)
    threshold24 = min(int(round(p * (1 << 24))), 1 << 24)
    scale = 1.0 / (1.0 - p) if p < 1.0 else 0.0
    seed_arr = jnp.asarray([seed], dtype=jnp.int32)
    kernel = functools.partial(_pe_add_dropout_kernel,
                               threshold24=threshold24, scale=scale, n_cols=SD)
    out2 = pl.pallas_call(
        kernel,
        out_shape=out_shape,
        grid_spec=pltpu.PrefetchScalarGridSpec(
            num_scalar_prefetch=1,
            grid=grid,
            in_specs=[x_spec, pe_spec],
            out_specs=out_spec,
        ),
        compiler_params=cparams,
        cost_estimate=cost,
        # With the scalar-prefetch operand, x is input index 1.
        input_output_aliases=({1: 0} if donate_x else {}),
    )(seed_arr, x2, pe_flat)
    return out2.reshape(B, S, D)


# ---------------------------------------------------------------------------
# Main
# ---------------------------------------------------------------------------
if __name__ == "__main__":
    B, S, D = 2, 8, 32
    max_len = 64  # PyTorch default is 5000; the table is sliced to S anyway

    key = jax.random.PRNGKey(0)
    x = jax.random.normal(key, (B, S, D), dtype=jnp.float32)

    pe_table = make_pe_table(D, max_len=max_len)
    ref = x + pe_table[None, :S, :]

    # Eval-mode forward (dropout is identity, matching nn.Dropout.eval()).
    out = positional_encoding(x, pe_table, dropout_p=0.1, training=False)
    out = jax.block_until_ready(out)
    assert jnp.allclose(out, ref, atol=1e-6, rtol=1e-6), "eval mismatch vs reference"

    # Training-mode forward: every element must be 0 (dropped) or (x+pe)/(1-p).
    # (RNG stream differs from torch's nn.Dropout, which is unavoidable.)
    p = 0.1
    out_tr = positional_encoding(x, pe_table, dropout_p=p, training=True, seed=123)
    out_tr = jax.block_until_ready(out_tr)
    kept_val = ref * (1.0 / (1.0 - p))
    kept = jnp.isclose(out_tr, kept_val, atol=1e-5, rtol=1e-5)
    dropped = jnp.isclose(out_tr, 0.0, atol=1e-6)
    assert bool(jnp.all(kept | dropped)), "dropout output structure mismatch"

    # Donated-input eval call (x is not used again afterwards).
    out_d = positional_encoding(x, pe_table, training=False, donate_x=True)
    out_d = jax.block_until_ready(out_d)
    assert jnp.allclose(out_d, ref, atol=1e-6, rtol=1e-6), "donated-x mismatch"

    print("KERNEL_OK")
</pallas_src>

<mosaic_0001>
module attributes {stable_mosaic.version = 11 : i64} {
  func.func @_pe_add_kernel(%arg0: i32, %arg1: i32, %arg2: memref<2x256xf32, #tpu.memory_space<vmem>>, %arg3: memref<1x256xf32, #tpu.memory_space<vmem>>, %arg4: memref<2x256xf32, #tpu.memory_space<vmem>>) attributes {dimension_semantics = [#tpu.dimension_semantics<parallel>, #tpu.dimension_semantics<parallel>], iteration_bounds = array<i64: 1, 1>, scalar_prefetch = 0 : i64, scratch_operands = 0 : i64, tpu.core_type = #tpu.core_type<tc>, window_params = [{transform_indices = @transform_0, window_bounds = array<i64: 2, 256>}, {transform_indices = @transform_1, window_bounds = array<i64: 1, 256>}, {transform_indices = @transform_2, window_bounds = array<i64: 2, 256>}]} {
    %c0 = arith.constant 0 : index
    %c0_0 = arith.constant 0 : index
    %0 = vector.load %arg2[%c0, %c0_0] : memref<2x256xf32, #tpu.memory_space<vmem>>, vector<2x256xf32>
    %c0_1 = arith.constant 0 : index
    %c0_2 = arith.constant 0 : index
    %1 = vector.load %arg3[%c0_1, %c0_2] : memref<1x256xf32, #tpu.memory_space<vmem>>, vector<1x256xf32>
    %2 = vector.broadcast %1 : vector<1x256xf32> to vector<2x256xf32>
    %3 = arith.addf %0, %2 : vector<2x256xf32>
    %c0_3 = arith.constant 0 : index
    %c0_4 = arith.constant 0 : index
    %4 = vector.load %arg4[%c0_3, %c0_4] : memref<2x256xf32, #tpu.memory_space<vmem>>, vector<2x256xf32>
    tpu.vector_store %arg4[%c0_3, %c0_4], %3 {strides = array<i32>} : memref<2x256xf32, #tpu.memory_space<vmem>>, vector<2x256xf32>,
    return
  }
  func.func @transform_0(%arg0: i32, %arg1: i32) -> (i32, i32) {
    %c0_i32 = arith.constant 0 : i32
    return %arg1, %arg0 : i32, i32
  }
  func.func @transform_1(%arg0: i32, %arg1: i32) -> (i32, i32) {
    %c0_i32 = arith.constant 0 : i32
    %c0_i32_0 = arith.constant 0 : i32
    return %c0_i32, %arg0 : i32, i32
  }
  func.func @transform_2(%arg0: i32, %arg1: i32) -> (i32, i32) {
    %c0_i32 = arith.constant 0 : i32
    return %arg1, %arg0 : i32, i32
  }
}

</mosaic_0001>

<llo_original>
// kernel: tpu_custom_call.1
$region0: #{tpu_custom_call.1}
  #allocation0 [shape = 'u32[]', space=smem, size = 0x4, offset = 0x4, fixed_abs, tag = 'smem constant byte address 0x4 - core index']
  #allocation1 [shape = 'u32[144,128]{1,0:T(1,128)}', space=vmem, size = 0x12000, scoped, tag = 'internal scratch']
  %s0 = inlined_call_operand.hbm [shape: f32[2,256], index: 0, kind: input, shape index: {}]
  %s1 = inlined_call_operand.vmem [shape: f32[1,256], index: 1, kind: input, shape index: {}]
  %s2 = inlined_call_operand.hbm [shape: f32[2,256], index: 2, kind: output, shape index: {}]
  %s3 = sld [smem:[#allocation0]]
  $region22: #{tpu_custom_call.1} parent=0
    _
  %s5 = ssub.s32 1, %s3
  %s6 = scalar_select 0, %s5, %s3
  $region1: #{tpu_custom_call.1} parent=0
    #allocation2 [shape = 'u8[2048]{0}', space=vmem, size = 0x800, scoped, tag = 'input window, operand 0, single buffered']
    #allocation3 [shape = 's32[1]{0}', space=sflag, size = 0x4, scoped, tag = 'scoped memory for tpu_custom_call.1']
    #allocation4 [shape = 's32[1]{0}', space=sflag, size = 0x4, scoped, tag = 'scoped memory for tpu_custom_call.1']
    #allocation5 [shape = 'u8[2048]{0}', space=vmem, size = 0x800, scoped, tag = 'output window, operand 0, single buffered']
    %7 = vsyncpa [#allocation3], 0
    %8 = vsyncpa [#allocation4], 0
    // Predicated region
    $region2: #{tpu_custom_call.1} parent=1 // pred_check
      _
    $region3: #{tpu_custom_call.1} parent=1 // pred_check_branch
      %10 = sbr.rel (0) target = $region5
    $region4: #{tpu_custom_call.1} parent=1 // pred_region
      %s12 = ssub.s32 64, 64
      %13 = vsyncadd [#allocation3], %s12
      %s15 = sshll.u32 [#allocation2], 4
      %s16 = int_to_ptr.vmem [resolvable:$true] %s15
      %18 = dma.hbm_to_vmem [thread:$0]  %s0, 64, %s16, [#allocation3]
    $region5: #{tpu_custom_call.1} parent=1 // pred_fallthru
      _
    // Predicated region
    $region6: #{tpu_custom_call.1} parent=1 // pred_check
      _
    $region7: #{tpu_custom_call.1} parent=1 // pred_check_branch
      %20 = sbr.rel (0) target = $region9
    $region8: #{tpu_custom_call.1} parent=1 // pred_region
      _
    $region9: #{tpu_custom_call.1} parent=1 // pred_fallthru
      _
    // Predicated region
    $region10: #{tpu_custom_call.1} parent=1 // pred_check
      _
    $region11: #{tpu_custom_call.1} parent=1 // pred_check_branch
      %22 = sbr.rel (0) target = $region13
    $region12: #{tpu_custom_call.1} parent=1 // pred_region
      %23 = dma.done [#allocation3], 64
    $region13: #{tpu_custom_call.1} parent=1 // pred_fallthru
      _
    %v24 = vld [vmem:[#allocation2] sm:$0xf]
    %v25 = vld [vmem:[%s1] sm:$0x3]
    %v27 = vlaneseq
    %v28 = vshrl.u32 %v27, 7
    %v29 = vsub.s32 0, %v28
    %v30 = vrot.slane %v25, %v29
    %v31 = vlaneseq
    %v32 = vshrl.u32 %v31, 7
    %v33 = vsub.s32 1, %v32
    %v34 = vrot.slane %v25, %v33
    %v35 = vcombine.low %v30, %v34
    %v37 = vunpack.c.l.s4 1983009808
    %v38 = vunpack.c.0.s8 %v37
    %v39 = vlaneseq
    %v40 = vshrl.u32 %v39, 7
    %v41 = vsub.s32 %v38, %v40
    %v42 = vrot.slane %v35, %v41
    %v44 = vadd.f32 %v24, %v42
    %45 = vst [vmem:[#allocation5] sm:$0xf] %v44
    // Predicated region
    $region14: #{tpu_custom_call.1} parent=1 // pred_check
      _
    $region15: #{tpu_custom_call.1} parent=1 // pred_check_branch
      %47 = sbr.rel (0) target = $region17
    $region16: #{tpu_custom_call.1} parent=1 // pred_region
      %s49 = ssub.s32 64, 64
      %50 = vsyncadd [#allocation4], %s49
      %s52 = sshll.u32 [#allocation5], 4
      %s53 = int_to_ptr.vmem [resolvable:$true] %s52
      %55 = dma.vmem_to_hbm [thread:$0]  %s53, 64, %s2, [#allocation4]
    $region17: #{tpu_custom_call.1} parent=1 // pred_fallthru
      _
    // Predicated region
    $region18: #{tpu_custom_call.1} parent=1 // pred_check
      _
    $region19: #{tpu_custom_call.1} parent=1 // pred_check_branch
      %57 = sbr.rel (0) target = $region21
    $region20: #{tpu_custom_call.1} parent=1 // pred_region
      %58 = dma.done [#allocation4], 64
    $region21: #{tpu_custom_call.1} parent=1 // pred_fallthru
      _
    %59 = vsyncpa [#allocation3], 1
    %60 = vsyncpa [#allocation4], 1

</llo_original>
